<compile_context>
chip_gen: v7x
topology: tpu7x:2x2x1
jax: 0.10.0
libtpu: 0.0.40
codegen_flags: <defaults>
</compile_context>

<pallas_src>
import jax
import jax.numpy as jnp
from jax.experimental import pallas as pl
from jax.experimental.pallas import tpu as pltpu


TARGET_BLOCK_BYTES = 8 << 20   # ~8 MiB x-block -> 6 buffers ~= 48 MiB; on the HBM plateau everywhere
VMEM_LIMIT_BYTES = 48 << 20    # scoped VMEM: <= v7x's 64 MiB physical; raises v5e/v6e defaults


def _round_down(v, m):
    return (v // m) * m


def _round_up(v, m):
    return -(-v // m) * m


def _pos_embed_kernel(x_ref, pos_ref, o_ref):
    # x_ref: (bblk, lblk) activation slab; pos_ref: (1, lblk) embedding tile.
    # The add broadcasts pos over the leading (batch) dim.
    o_ref[...] = x_ref[...] + pos_ref[...]


def _choose_blocks(B, L, itemsize, target_bytes):
    """Pick (bblk, lblk) so one (bblk, lblk) block is ~target_bytes.

    Live VMEM ~= 2*(x block) + 2*(out block) + 2*(pos block) (double buffering;
    the HBM alias does NOT remove the separate output VMEM buffer), so the
    caller passes target_bytes <= vmem_limit_bytes // 6.
    """
    sub = max(8, 32 // itemsize)   # packed-sublane multiple: 8 (f32), 16 (bf16), 32 (i8/fp8)
    lane = 128

    # Last-dim tile: keep full L (lane-dense, unmasked vst) unless even a minimal
    # `sub`-row block blows the budget (very wide N*D), in which case tile L in
    # 128-lane multiples instead of exceeding the scoped VMEM limit.
    if sub * L * itemsize > target_bytes:
        lblk = _round_down(max(lane, target_bytes // (sub * itemsize)), lane)
        lblk = min(lblk, L)
    else:
        lblk = L

    # Batch tile against the budget for this lblk.
    row_bytes = lblk * itemsize
    bblk = max(sub, _round_down(target_bytes // max(1, row_bytes), sub))
    if bblk >= B:
        bblk = B                   # full-dim escape of the (8,128) sublane rule
    # else: bblk is a multiple of sub (>= 8), satisfying the sublane rule.

    # v7x megacore: if the batch axis gives only one grid step, split L so the
    # second TensorCore has work (>=512-lane, 128-aligned chunks). Neutral on
    # single-core v5e/v6e.
    n_b = -(-B // bblk)
    if n_b == 1 and lblk == L and L >= 1024:
        lblk = _round_up(-(-L // 2), lane)   # multiple of 128, >= 512, < L

    return bblk, lblk


def position_embed(x, pos, *, target_block_bytes=TARGET_BLOCK_BYTES,
                   vmem_limit_bytes=VMEM_LIMIT_BYTES):
    """x: (B, N, D), pos: (1, N, D) -> (B, N, D) = x + pos (broadcast over batch)."""
    B, N, D = x.shape
    assert pos.shape == (1, N, D)
    pos = pos.astype(x.dtype)

    # Lane-dense layout: flatten trailing (N, D) -> L so the last dim is wide.
    L = N * D
    x2 = x.reshape(B, L)
    pos2 = pos.reshape(1, L)

    itemsize = jnp.dtype(x.dtype).itemsize
    # 6 live block-buffers (2x in + 2x out + 2x pos) must fit the scoped limit.
    eff_target = min(int(target_block_bytes), int(vmem_limit_bytes) // 6)
    bblk, lblk = _choose_blocks(B, L, itemsize, eff_target)
    grid = (pl.cdiv(B, bblk), pl.cdiv(L, lblk))

    out = pl.pallas_call(
        _pos_embed_kernel,
        out_shape=jax.ShapeDtypeStruct((B, L), x.dtype),
        grid_spec=pl.GridSpec(
            grid=grid,
            in_specs=[
                # Multi-row activation slab.  (If profiling ever shows exposed
                # input-DMA gaps, sweep pipeline_mode=pl.Buffered(3) here.)
                pl.BlockSpec((bblk, lblk), lambda b, l: (b, l)),
                # pos: constant over the batch axis -> same tile re-used.
                pl.BlockSpec((1, lblk), lambda b, l: (0, l)),
            ],
            out_specs=pl.BlockSpec((bblk, lblk), lambda b, l: (b, l)),
        ),
        # In-place add (matches PyTorch `x += pos`); only truly in place when the
        # caller donates x (see position_embed_inplace below).
        input_output_aliases={0: 0},
        compiler_params=pltpu.CompilerParams(
            dimension_semantics=("parallel", "parallel"),
            vmem_limit_bytes=int(vmem_limit_bytes),
        ),
    )(x2, pos2)

    return out.reshape(B, N, D)


# Donating entry point: makes the input_output_aliases alias real (no hidden copy
# of x), giving the true 2x|x| HBM traffic floor.  Callers must not reuse x after.
position_embed_inplace = jax.jit(
    position_embed,
    donate_argnums=(0,),
    static_argnames=("target_block_bytes", "vmem_limit_bytes"),
)


if __name__ == "__main__":
    # Module config: img_size=16, patch_size=4 -> n_patches = (16//4)**2 = 16
    img_size, patch_size, out_size = 16, 4, 32
    n_patches = (img_size // patch_size) * (img_size // patch_size)
    N = n_patches + 1          # +1 for the CLS token
    B = 2

    key = jax.random.PRNGKey(0)
    kx, kp = jax.random.split(key)
    x = jax.random.normal(kx, (B, N, out_size), dtype=jnp.float32)
    # nn.Parameter is zero-initialized in __init__; use nonzero values here so the
    # broadcast add is actually exercised.
    pos = jax.random.normal(kp, (1, N, out_size), dtype=jnp.float32)

    # Reference computed BEFORE the donating call (x is clobbered/donated by it).
    ref = x + pos

    out = position_embed_inplace(x, pos)
    out = jax.block_until_ready(out)
    assert out.shape == (B, N, out_size)
    assert jnp.allclose(out, ref, atol=1e-6, rtol=1e-6)

    # Exercise the multi-block path (tiny budget forces a 2-D grid with a partial
    # trailing L block).  Fresh x since the previous one was donated.
    x2 = jax.random.normal(kx, (B, N, out_size), dtype=jnp.float32)
    ref2 = x2 + pos
    out2 = jax.block_until_ready(position_embed(x2, pos, target_block_bytes=4096))
    assert jnp.allclose(out2, ref2, atol=1e-6, rtol=1e-6)

    # bf16 path (halves HBM traffic on this bandwidth-bound op; kernel is dtype-generic).
    xb = x2.astype(jnp.bfloat16)
    pb = pos.astype(jnp.bfloat16)
    refb = (xb + pb).astype(jnp.float32)
    outb = jax.block_until_ready(position_embed(xb, pb)).astype(jnp.float32)
    assert jnp.allclose(outb, refb, atol=1e-2, rtol=1e-2)

    print("KERNEL_OK")
</pallas_src>

<mosaic_0001>
module attributes {stable_mosaic.version = 11 : i64} {
  func.func @_pos_embed_kernel(%arg0: i32, %arg1: i32, %arg2: memref<2x544xf32, #tpu.memory_space<vmem>>, %arg3: memref<1x544xf32, #tpu.memory_space<vmem>>, %arg4: memref<2x544xf32, #tpu.memory_space<vmem>>) attributes {dimension_semantics = [#tpu.dimension_semantics<parallel>, #tpu.dimension_semantics<parallel>], iteration_bounds = array<i64: 1, 1>, scalar_prefetch = 0 : i64, scratch_operands = 0 : i64, tpu.core_type = #tpu.core_type<tc>, window_params = [{transform_indices = @transform_0, window_bounds = array<i64: 2, 544>}, {transform_indices = @transform_1, window_bounds = array<i64: 1, 544>}, {transform_indices = @transform_2, window_bounds = array<i64: 2, 544>}]} {
    %c0 = arith.constant 0 : index
    %c0_0 = arith.constant 0 : index
    %0 = vector.load %arg2[%c0, %c0_0] : memref<2x544xf32, #tpu.memory_space<vmem>>, vector<2x544xf32>
    %c0_1 = arith.constant 0 : index
    %c0_2 = arith.constant 0 : index
    %1 = vector.load %arg3[%c0_1, %c0_2] : memref<1x544xf32, #tpu.memory_space<vmem>>, vector<1x544xf32>
    %2 = vector.broadcast %1 : vector<1x544xf32> to vector<2x544xf32>
    %3 = arith.addf %0, %2 : vector<2x544xf32>
    %c0_3 = arith.constant 0 : index
    %c0_4 = arith.constant 0 : index
    %4 = vector.load %arg4[%c0_3, %c0_4] : memref<2x544xf32, #tpu.memory_space<vmem>>, vector<2x544xf32>
    tpu.vector_store %arg4[%c0_3, %c0_4], %3 {strides = array<i32>} : memref<2x544xf32, #tpu.memory_space<vmem>>, vector<2x544xf32>,
    return
  }
  func.func @transform_0(%arg0: i32, %arg1: i32) -> (i32, i32) {
    %c0_i32 = arith.constant 0 : i32
    return %arg0, %arg1 : i32, i32
  }
  func.func @transform_1(%arg0: i32, %arg1: i32) -> (i32, i32) {
    %c0_i32 = arith.constant 0 : i32
    %c0_i32_0 = arith.constant 0 : i32
    return %c0_i32, %arg1 : i32, i32
  }
  func.func @transform_2(%arg0: i32, %arg1: i32) -> (i32, i32) {
    %c0_i32 = arith.constant 0 : i32
    return %arg0, %arg1 : i32, i32
  }
}

</mosaic_0001>

<llo_original>
// kernel: position_embed.1
$region0: #{position_embed.1}
  #allocation0 [shape = 'u32[]', space=smem, size = 0x4, offset = 0x4, fixed_abs, tag = 'smem constant byte address 0x4 - core index']
  #allocation1 [shape = 'u32[144,128]{1,0:T(1,128)}', space=vmem, size = 0x12000, scoped, tag = 'internal scratch']
  %s0 = inlined_call_operand.vmem [shape: f32[2,544], index: 0, kind: input, shape index: {}, may-alias: {0,2}]
  %s1 = inlined_call_operand.vmem [shape: f32[1,544], index: 1, kind: input, shape index: {}]
  %s2 = inlined_call_operand.vmem [shape: f32[2,544], index: 2, kind: output, shape index: {}, may-alias: {0,2}]
  %s3 = sld [smem:[#allocation0]]
  $region18: #{position_embed.1} parent=0
    _
  %s5 = ssub.s32 1, %s3
  %s6 = scalar_select 0, %s5, %s3
  // Predicated region
  $region2: #{position_embed.1} parent=0 // pred_check
    _
  $region3: #{position_embed.1} parent=0 // pred_check_branch
    %8 = sbr.rel (0) target = $region5
  $region4: #{position_embed.1} parent=0 // pred_region
    _
  $region5: #{position_embed.1} parent=0 // pred_fallthru
    _
  // Predicated region
  $region6: #{position_embed.1} parent=0 // pred_check
    _
  $region7: #{position_embed.1} parent=0 // pred_check_branch
    %10 = sbr.rel (0) target = $region9
  $region8: #{position_embed.1} parent=0 // pred_region
    _
  $region9: #{position_embed.1} parent=0 // pred_fallthru
    _
  %v11 = vld [vmem:[%s0] sm:$0xff]
  %v12 = vld [vmem:[%s0 + $0x8] sm:$0x3]
  %v13 = vld [vmem:[%s1] sm:$0x1f]
  %v15 = vlaneseq
  %v16 = vshrl.u32 %v15, 7
  %v17 = vsub.s32 0, %v16
  %v18 = vrot.slane %v13, %v17
  %v19 = vlaneseq
  %v20 = vshrl.u32 %v19, 7
  %v21 = vsub.s32 1, %v20
  %v22 = vrot.slane %v13, %v21
  %v23 = vlaneseq
  %v24 = vshrl.u32 %v23, 7
  %v25 = vsub.s32 2, %v24
  %v26 = vrot.slane %v13, %v25
  %v27 = vlaneseq
  %v28 = vshrl.u32 %v27, 7
  %v29 = vsub.s32 3, %v28
  %v30 = vrot.slane %v13, %v29
  %v31 = vlaneseq
  %v32 = vshrl.u32 %v31, 7
  %v33 = vsub.s32 4, %v32
  %v34 = vrot.slane %v13, %v33
  %v35 = vcombine.low %v18, %v22
  %v36 = vcombine.low %v26, %v30
  %v38 = vunpack.c.l.s4 1983009808
  %v39 = vunpack.c.0.s8 %v38
  %v40 = vlaneseq
  %v41 = vshrl.u32 %v40, 7
  %v42 = vsub.s32 %v39, %v41
  %v43 = vrot.slane %v35, %v42
  %v45 = vunpack.c.l.s4 1983009808
  %v46 = vunpack.c.0.s8 %v45
  %v47 = vlaneseq
  %v48 = vshrl.u32 %v47, 7
  %v49 = vsub.s32 %v46, %v48
  %v50 = vrot.slane %v36, %v49
  %v51 = vcombine.low %v43, %v50
  %v53 = vunpack.c.l.s4 1983009808
  %v54 = vunpack.c.0.s8 %v53
  %v55 = vlaneseq
  %v56 = vshrl.u32 %v55, 7
  %v57 = vsub.s32 %v54, %v56
  %v58 = vrot.slane %v34, %v57
  %v61 = vadd.f32 %v11, %v51
  %v62 = vadd.f32 %v12, %v58
  %63 = vst [vmem:[%s2] sm:$0xff] %v61
  %vm64 = vcmask 254976
  %65 = vst.msk [vmem:[%s2 + $0x8] sm:$0x3] %vm64, %v62
  // Predicated region
  $region10: #{position_embed.1} parent=0 // pred_check
    _
  $region11: #{position_embed.1} parent=0 // pred_check_branch
    %67 = sbr.rel (0) target = $region13
  $region12: #{position_embed.1} parent=0 // pred_region
    _
  $region13: #{position_embed.1} parent=0 // pred_fallthru
    _
  // Predicated region
  $region14: #{position_embed.1} parent=0 // pred_check
    _
  $region15: #{position_embed.1} parent=0 // pred_check_branch
    %69 = sbr.rel (0) target = $region17
  $region16: #{position_embed.1} parent=0 // pred_region
    _
  $region17: #{position_embed.1} parent=0 // pred_fallthru
    _

</llo_original>
